<compile_context>
chip_gen: v5e
topology: v5e:2x2
jax: 0.10.0
libtpu: 0.0.40
codegen_flags: <defaults>
</compile_context>

<pallas_src>
import functools

import jax
import jax.numpy as jnp
from jax.experimental import pallas as pl
from jax.experimental.pallas import tpu as pltpu

_SUBLANE = 8     # f32 sublane tile
_LANE = 128      # lane tile


# --------------------------------------------------------------------------
# B-spline basis N(i=2, k=2, x, t) for the fixed knot vector
# t = [-1.5, -1.5, -1.5, -0.5, 0.5, 1.5, 1.5, 1.5].
# The De Boor recursion in Bsplines_knots.N_torch collapses to the classic
# quadratic B-spline bump:
#     0.5 * (1.5 - |x|)^2   for 0.5 <= |x| < 1.5
#     0.75 - x^2            for       |x| < 0.5
#     0                     otherwise
# Identical to the half-open-interval mask formulation (the function is
# continuous at the knots).  ~9 VALU ops/element instead of ~18.
# --------------------------------------------------------------------------
def _bspline_n22_fast(x):
    ax = jnp.abs(x)
    t = 1.5 - ax
    outer = 0.5 * t * t          # 0.5 <= |x| < 1.5 branch
    inner = 0.75 - x * x         # |x| < 0.5 branch
    y = jnp.where(ax < 0.5, inner, outer)
    return jnp.where(ax < 1.5, y, 0.0)


def _inr_kernel(n_bspline_layers, x_ref, *refs):
    """refs = (w0, b0, w1, b1, ..., w_final, b_final, out_ref).

    Transposed layout: x_ref is (K0, tile_n); activations are
    (features, tile_n); out_ref is (d_out, tile_n).  All weights stay in
    native nn.Linear (out, in) shape so every layer is a plain  W @ h  on the
    MXU -- the VALU slot is the critical one here (the B-spline is ~10 VALU
    ops per element per layer), so even the degenerate first / last matmuls
    go to the otherwise idle MXU.  Biases are (out, 1) and lane-broadcast
    for free.
    """
    out_ref = refs[-1]
    params = refs[:-1]

    h = x_ref[...]                                        # (K0, tile_n)

    # ---- B-spline layers: (out, in) @ (in, tile_n) on the MXU + VPU bump
    for l in range(n_bspline_layers):
        w = params[2 * l][...]                            # (out, in)
        b = params[2 * l + 1][...]                        # (out, 1)
        h = jnp.dot(w, h, preferred_element_type=jnp.float32) + b
        h = _bspline_n22_fast(h)

    # ---- outermost plain Linear (also MXU; result stays lane-dense)
    wf = params[-2][...]                                  # (d_out, hidden)
    bf = params[-1][...]                                  # (d_out, 1)
    out_ref[...] = jnp.dot(wf, h, preferred_element_type=jnp.float32) + bf


# --------------------------------------------------------------------------
# Wrapper-side helpers (layout plumbing, hoistable / cacheable per the review)
# --------------------------------------------------------------------------
def _round_up(x, m):
    return -(-x // m) * m


def _halve_tile(t):
    return max(_LANE, ((t // 2) // _LANE) * _LANE)


def _tensorcores_per_chip():
    """Best-effort TensorCore count per chip: v7x has 2, v4/v5e/v6e have 1."""
    try:
        kind = jax.devices()[0].device_kind.lower()
    except Exception:
        return 1
    if "v7" in kind or "7x" in kind:
        return 2
    return 1


def choose_tile_n(n_points, tile_n=4096):
    """Pick the point tile: big enough to amortize the ~0.35 us per-grid-step
    cost, never (much) bigger than the padded problem, and only split into
    >= 2 grid steps when there are 2 TensorCores to feed (v7x)."""
    tile_n = max(_LANE, (tile_n // _LANE) * _LANE)
    n_pad = _round_up(max(n_points, 1), _LANE)
    while tile_n > 256 and tile_n >= 2 * n_pad:
        tile_n = _halve_tile(tile_n)
    if _tensorcores_per_chip() >= 2:
        while tile_n > 256 and _round_up(n_points, tile_n) // tile_n < 2:
            tile_n = _halve_tile(tile_n)
    return tile_n


def prepare_params(params):
    """Flatten (w, b) pairs into kernel-ready arrays.

    Weights stay in native nn.Linear (out, in) shape; the first layer's tiny
    contraction dim is zero-padded up to one f32 sublane tile (8) to match the
    padded coords.  Biases become (out, 1) columns (free lane-broadcast).
    Cache the result when parameters are reused across calls.
    """
    flat = []
    for li, (w, b) in enumerate(params):
        if li == 0:
            k0 = _round_up(w.shape[1], _SUBLANE)
            if k0 != w.shape[1]:
                w = jnp.pad(w, ((0, 0), (0, k0 - w.shape[1])))
        flat += [w, b.reshape(-1, 1)]
    return flat


def prepare_coords(coords, tile_n):
    """(N, d_in) -> transposed, zero-padded (K0, grid_n * tile_n) layout.

    This is the only per-call XLA layout pass over the coords; hoist / cache
    it when the evaluation grid is static across training steps.
    """
    n_points, d_in = coords.shape
    k0 = _round_up(d_in, _SUBLANE)
    n_total = _round_up(n_points, tile_n)
    x_t = coords.T                                        # (d_in, N)
    x_t = jnp.pad(x_t, ((0, k0 - d_in), (0, n_total - n_points)))
    return x_t                                            # (K0, n_total)


def inr_forward_prepared(x_t, flat_params, n_points, *, tile_n,
                         vmem_limit_bytes=32 * 1024 * 1024):
    """x_t: (K0, n_total) prepared coords; flat_params from prepare_params."""
    k0, n_total = x_t.shape
    assert n_total % tile_n == 0 and tile_n % _LANE == 0
    grid_n = n_total // tile_n
    n_layers = len(flat_params) // 2
    n_bspline = n_layers - 1             # every layer but the last is B-spline
    d_out = flat_params[-2].shape[0]

    in_specs = [pl.BlockSpec((k0, tile_n), lambda i: (0, i))]
    for p in flat_params:
        # Whole weight / bias resident in VMEM, constant block index.
        in_specs.append(pl.BlockSpec(p.shape, lambda i: (0, 0)))

    kernel = functools.partial(_inr_kernel, n_bspline)
    out_t = pl.pallas_call(
        kernel,
        out_shape=jax.ShapeDtypeStruct((d_out, n_total), jnp.float32),
        grid=(grid_n,),
        in_specs=in_specs,
        out_specs=pl.BlockSpec((d_out, tile_n), lambda i: (0, i)),
        compiler_params=pltpu.CompilerParams(
            dimension_semantics=("parallel",),
            # Explicit cap: safe on v7x (64 MiB physical), raises v5e's 16 MiB
            # scoped default; the working set at tile_n=8192 is only ~6 MiB.
            vmem_limit_bytes=vmem_limit_bytes),
    )(x_t, *flat_params)

    return out_t[:, :n_points].T                          # back to (N, d_out)


def inr_forward(coords, params, *, tile_n=4096):
    """coords: (N, in_features) f32.
    params: list of (w, b) in native nn.Linear shapes: w (out, in), b (out,).
    Returns (N, out_features) f32.

    For repeated evaluation on a static grid, call prepare_coords /
    prepare_params once and reuse them with inr_forward_prepared.
    """
    n_points = coords.shape[0]
    tile_n = choose_tile_n(n_points, tile_n)
    x_t = prepare_coords(coords, tile_n)
    flat = prepare_params(params)
    return inr_forward_prepared(x_t, flat, n_points, tile_n=tile_n)


# --------------------------------------------------------------------------
# Deterministic parameter init (PyTorch nn.Linear default: U(-1/sqrt(in), 1/sqrt(in)))
# Weights kept in native nn.Linear (out, in) shape, biases (out,).
# --------------------------------------------------------------------------
def init_inr_params(key, in_features, hidden_features, hidden_layers, out_features):
    dims = [(in_features, hidden_features)]
    dims += [(hidden_features, hidden_features)] * hidden_layers
    dims += [(hidden_features, out_features)]             # final plain linear
    params = []
    for (din, dout) in dims:
        key, kw, kb = jax.random.split(key, 3)
        bound = 1.0 / jnp.sqrt(jnp.float32(din))
        w = jax.random.uniform(kw, (dout, din), jnp.float32, -bound, bound)
        b = jax.random.uniform(kb, (dout,), jnp.float32, -bound, bound)
        params.append((w, b))
    return params


# --------------------------------------------------------------------------
# Pure-JAX reference of INR.forward using the torch-style half-open-interval
# mask formulation of the B-spline basis (faithful to Bsplines_knots.N_torch).
# --------------------------------------------------------------------------
def _bspline_n22_masks(x):
    m0 = ((x >= -1.5) & (x < -0.5)).astype(x.dtype)
    m1 = ((x >= -0.5) & (x < 0.5)).astype(x.dtype)
    m2 = ((x >= 0.5) & (x < 1.5)).astype(x.dtype)
    n21 = (x + 1.5) * m0 + (0.5 - x) * m1
    n31 = (x + 0.5) * m1 + (1.5 - x) * m2
    return 0.5 * (x + 1.5) * n21 + 0.5 * (1.5 - x) * n31


def inr_reference(coords, params):
    h = coords
    for (w, b) in params[:-1]:
        h = _bspline_n22_masks(h @ w.T + b)
    wf, bf = params[-1]
    return h @ wf.T + bf


if __name__ == "__main__":
    # Small config consistent with the module: coords (N, in_features).
    in_features, hidden_features, hidden_layers, out_features = 2, 32, 2, 1

    key = jax.random.PRNGKey(0)
    key, kc = jax.random.split(key)
    # 16x16 grid of 2-D coordinates in [-1, 1] -> N = 256 points.
    side = 16
    lin = jnp.linspace(-1.0, 1.0, side, dtype=jnp.float32)
    xx, yy = jnp.meshgrid(lin, lin, indexing="ij")
    coords = jnp.stack([xx.ravel(), yy.ravel()], axis=-1)   # (256, 2)

    params = init_inr_params(key, in_features, hidden_features,
                             hidden_layers, out_features)

    out = inr_forward(coords, params)
    out = jax.block_until_ready(out)

    ref = inr_reference(coords, params)
    assert out.shape == (coords.shape[0], out_features)
    assert jnp.allclose(out, ref, atol=1e-5, rtol=1e-5), "mismatch vs reference"

    print("KERNEL_OK")
</pallas_src>

<mosaic_0001>
module attributes {stable_mosaic.version = 11 : i64} {
  func.func @_inr_kernel(%arg0: i32, %arg1: memref<8x256xf32, #tpu.memory_space<vmem>>, %arg2: memref<32x8xf32, #tpu.memory_space<vmem>>, %arg3: memref<32x1xf32, #tpu.memory_space<vmem>>, %arg4: memref<32x32xf32, #tpu.memory_space<vmem>>, %arg5: memref<32x1xf32, #tpu.memory_space<vmem>>, %arg6: memref<32x32xf32, #tpu.memory_space<vmem>>, %arg7: memref<32x1xf32, #tpu.memory_space<vmem>>, %arg8: memref<1x32xf32, #tpu.memory_space<vmem>>, %arg9: memref<1x1xf32, #tpu.memory_space<vmem>>, %arg10: memref<1x256xf32, #tpu.memory_space<vmem>>) attributes {dimension_semantics = [#tpu.dimension_semantics<parallel>], iteration_bounds = array<i64: 1>, scalar_prefetch = 0 : i64, scratch_operands = 0 : i64, tpu.core_type = #tpu.core_type<tc>, window_params = [{transform_indices = @transform_0, window_bounds = array<i64: 8, 256>}, {pipeline_mode = #tpu.pipeline_mode<synchronous>, transform_indices = @transform_1, window_bounds = array<i64: 32, 8>}, {pipeline_mode = #tpu.pipeline_mode<synchronous>, transform_indices = @transform_2, window_bounds = array<i64: 32, 1>}, {pipeline_mode = #tpu.pipeline_mode<synchronous>, transform_indices = @transform_3, window_bounds = array<i64: 32, 32>}, {pipeline_mode = #tpu.pipeline_mode<synchronous>, transform_indices = @transform_4, window_bounds = array<i64: 32, 1>}, {pipeline_mode = #tpu.pipeline_mode<synchronous>, transform_indices = @transform_5, window_bounds = array<i64: 32, 32>}, {pipeline_mode = #tpu.pipeline_mode<synchronous>, transform_indices = @transform_6, window_bounds = array<i64: 32, 1>}, {pipeline_mode = #tpu.pipeline_mode<synchronous>, transform_indices = @transform_7, window_bounds = array<i64: 1, 32>}, {pipeline_mode = #tpu.pipeline_mode<synchronous>, transform_indices = @transform_8, window_bounds = array<i64: 1, 1>}, {transform_indices = @transform_9, window_bounds = array<i64: 1, 256>}]} {
    %c0 = arith.constant 0 : index
    %c0_0 = arith.constant 0 : index
    %0 = vector.load %arg1[%c0, %c0_0] : memref<8x256xf32, #tpu.memory_space<vmem>>, vector<8x256xf32>
    %c0_1 = arith.constant 0 : index
    %c0_2 = arith.constant 0 : index
    %1 = vector.load %arg2[%c0_1, %c0_2] : memref<32x8xf32, #tpu.memory_space<vmem>>, vector<32x8xf32>
    %c0_3 = arith.constant 0 : index
    %c0_4 = arith.constant 0 : index
    %2 = vector.load %arg3[%c0_3, %c0_4] : memref<32x1xf32, #tpu.memory_space<vmem>>, vector<32x1xf32>
    %cst = arith.constant dense<0.000000e+00> : vector<32x256xf32>
    %3 = tpu.matmul %1, %0, %cst {dimension_numbers = #tpu.dot_dimension_numbers<[1], [0], [0], [1], [0, 0, 1, 1], [], []>} : vector<32x8xf32>, vector<8x256xf32>, vector<32x256xf32> -> vector<32x256xf32>
    %4 = vector.broadcast %2 : vector<32x1xf32> to vector<32x256xf32>
    %5 = arith.addf %3, %4 : vector<32x256xf32>
    %6 = math.absf %5 : vector<32x256xf32>
    %cst_5 = arith.constant 1.500000e+00 : f32
    %7 = vector.broadcast %cst_5 : f32 to vector<32x256xf32>
    %8 = arith.subf %7, %6 : vector<32x256xf32>
    %cst_6 = arith.constant 5.000000e-01 : f32
    %9 = vector.broadcast %cst_6 : f32 to vector<32x256xf32>
    %10 = arith.mulf %9, %8 : vector<32x256xf32>
    %11 = arith.mulf %10, %8 : vector<32x256xf32>
    %12 = arith.mulf %5, %5 : vector<32x256xf32>
    %cst_7 = arith.constant 7.500000e-01 : f32
    %13 = vector.broadcast %cst_7 : f32 to vector<32x256xf32>
    %14 = arith.subf %13, %12 : vector<32x256xf32>
    %cst_8 = arith.constant 5.000000e-01 : f32
    %15 = vector.broadcast %cst_8 : f32 to vector<32x256xf32>
    %16 = arith.cmpf olt, %6, %15 : vector<32x256xf32>
    %17 = arith.select %16, %14, %11 : vector<32x256xi1>, vector<32x256xf32>
    %cst_9 = arith.constant 1.500000e+00 : f32
    %18 = vector.broadcast %cst_9 : f32 to vector<32x256xf32>
    %19 = arith.cmpf olt, %6, %18 : vector<32x256xf32>
    %cst_10 = arith.constant 0.000000e+00 : f32
    %20 = vector.broadcast %cst_10 : f32 to vector<32x256xf32>
    %21 = arith.select %19, %17, %20 : vector<32x256xi1>, vector<32x256xf32>
    %c0_11 = arith.constant 0 : index
    %c0_12 = arith.constant 0 : index
    %22 = vector.load %arg4[%c0_11, %c0_12] : memref<32x32xf32, #tpu.memory_space<vmem>>, vector<32x32xf32>
    %c0_13 = arith.constant 0 : index
    %c0_14 = arith.constant 0 : index
    %23 = vector.load %arg5[%c0_13, %c0_14] : memref<32x1xf32, #tpu.memory_space<vmem>>, vector<32x1xf32>
    %cst_15 = arith.constant dense<0.000000e+00> : vector<32x256xf32>
    %24 = tpu.matmul %22, %21, %cst_15 {dimension_numbers = #tpu.dot_dimension_numbers<[1], [0], [0], [1], [0, 0, 1, 1], [], []>} : vector<32x32xf32>, vector<32x256xf32>, vector<32x256xf32> -> vector<32x256xf32>
    %25 = vector.broadcast %23 : vector<32x1xf32> to vector<32x256xf32>
    %26 = arith.addf %24, %25 : vector<32x256xf32>
    %27 = math.absf %26 : vector<32x256xf32>
    %cst_16 = arith.constant 1.500000e+00 : f32
    %28 = vector.broadcast %cst_16 : f32 to vector<32x256xf32>
    %29 = arith.subf %28, %27 : vector<32x256xf32>
    %cst_17 = arith.constant 5.000000e-01 : f32
    %30 = vector.broadcast %cst_17 : f32 to vector<32x256xf32>
    %31 = arith.mulf %30, %29 : vector<32x256xf32>
    %32 = arith.mulf %31, %29 : vector<32x256xf32>
    %33 = arith.mulf %26, %26 : vector<32x256xf32>
    %cst_18 = arith.constant 7.500000e-01 : f32
    %34 = vector.broadcast %cst_18 : f32 to vector<32x256xf32>
    %35 = arith.subf %34, %33 : vector<32x256xf32>
    %cst_19 = arith.constant 5.000000e-01 : f32
    %36 = vector.broadcast %cst_19 : f32 to vector<32x256xf32>
    %37 = arith.cmpf olt, %27, %36 : vector<32x256xf32>
    %38 = arith.select %37, %35, %32 : vector<32x256xi1>, vector<32x256xf32>
    %cst_20 = arith.constant 1.500000e+00 : f32
    %39 = vector.broadcast %cst_20 : f32 to vector<32x256xf32>
    %40 = arith.cmpf olt, %27, %39 : vector<32x256xf32>
    %cst_21 = arith.constant 0.000000e+00 : f32
    %41 = vector.broadcast %cst_21 : f32 to vector<32x256xf32>
    %42 = arith.select %40, %38, %41 : vector<32x256xi1>, vector<32x256xf32>
    %c0_22 = arith.constant 0 : index
    %c0_23 = arith.constant 0 : index
    %43 = vector.load %arg6[%c0_22, %c0_23] : memref<32x32xf32, #tpu.memory_space<vmem>>, vector<32x32xf32>
    %c0_24 = arith.constant 0 : index
    %c0_25 = arith.constant 0 : index
    %44 = vector.load %arg7[%c0_24, %c0_25] : memref<32x1xf32, #tpu.memory_space<vmem>>, vector<32x1xf32>
    %cst_26 = arith.constant dense<0.000000e+00> : vector<32x256xf32>
    %45 = tpu.matmul %43, %42, %cst_26 {dimension_numbers = #tpu.dot_dimension_numbers<[1], [0], [0], [1], [0, 0, 1, 1], [], []>} : vector<32x32xf32>, vector<32x256xf32>, vector<32x256xf32> -> vector<32x256xf32>
    %46 = vector.broadcast %44 : vector<32x1xf32> to vector<32x256xf32>
    %47 = arith.addf %45, %46 : vector<32x256xf32>
    %48 = math.absf %47 : vector<32x256xf32>
    %cst_27 = arith.constant 1.500000e+00 : f32
    %49 = vector.broadcast %cst_27 : f32 to vector<32x256xf32>
    %50 = arith.subf %49, %48 : vector<32x256xf32>
    %cst_28 = arith.constant 5.000000e-01 : f32
    %51 = vector.broadcast %cst_28 : f32 to vector<32x256xf32>
    %52 = arith.mulf %51, %50 : vector<32x256xf32>
    %53 = arith.mulf %52, %50 : vector<32x256xf32>
    %54 = arith.mulf %47, %47 : vector<32x256xf32>
    %cst_29 = arith.constant 7.500000e-01 : f32
    %55 = vector.broadcast %cst_29 : f32 to vector<32x256xf32>
    %56 = arith.subf %55, %54 : vector<32x256xf32>
    %cst_30 = arith.constant 5.000000e-01 : f32
    %57 = vector.broadcast %cst_30 : f32 to vector<32x256xf32>
    %58 = arith.cmpf olt, %48, %57 : vector<32x256xf32>
    %59 = arith.select %58, %56, %53 : vector<32x256xi1>, vector<32x256xf32>
    %cst_31 = arith.constant 1.500000e+00 : f32
    %60 = vector.broadcast %cst_31 : f32 to vector<32x256xf32>
    %61 = arith.cmpf olt, %48, %60 : vector<32x256xf32>
    %cst_32 = arith.constant 0.000000e+00 : f32
    %62 = vector.broadcast %cst_32 : f32 to vector<32x256xf32>
    %63 = arith.select %61, %59, %62 : vector<32x256xi1>, vector<32x256xf32>
    %c0_33 = arith.constant 0 : index
    %c0_34 = arith.constant 0 : index
    %64 = vector.load %arg8[%c0_33, %c0_34] : memref<1x32xf32, #tpu.memory_space<vmem>>, vector<1x32xf32>
    %c0_35 = arith.constant 0 : index
    %c0_36 = arith.constant 0 : index
    %65 = vector.load %arg9[%c0_35, %c0_36] : memref<1x1xf32, #tpu.memory_space<vmem>>, vector<1x1xf32>
    %cst_37 = arith.constant dense<0.000000e+00> : vector<1x256xf32>
    %66 = tpu.matmul %64, %63, %cst_37 {dimension_numbers = #tpu.dot_dimension_numbers<[1], [0], [0], [1], [0, 0, 1, 1], [], []>} : vector<1x32xf32>, vector<32x256xf32>, vector<1x256xf32> -> vector<1x256xf32>
    %67 = vector.broadcast %65 : vector<1x1xf32> to vector<1x256xf32>
    %68 = arith.addf %66, %67 : vector<1x256xf32>
    %c0_38 = arith.constant 0 : index
    %c0_39 = arith.constant 0 : index
    %69 = vector.load %arg10[%c0_38, %c0_39] : memref<1x256xf32, #tpu.memory_space<vmem>>, vector<1x256xf32>
    tpu.vector_store %arg10[%c0_38, %c0_39], %68 {strides = array<i32>} : memref<1x256xf32, #tpu.memory_space<vmem>>, vector<1x256xf32>,
    return
  }
  func.func @transform_0(%arg0: i32) -> (i32, i32) {
    %c0_i32 = arith.constant 0 : i32
    %c0_i32_0 = arith.constant 0 : i32
    return %c0_i32, %arg0 : i32, i32
  }
  func.func @transform_1(%arg0: i32) -> (i32, i32) {
    %c0_i32 = arith.constant 0 : i32
    %c0_i32_0 = arith.constant 0 : i32
    %c0_i32_1 = arith.constant 0 : i32
    return %c0_i32, %c0_i32_0 : i32, i32
  }
  func.func @transform_2(%arg0: i32) -> (i32, i32) {
    %c0_i32 = arith.constant 0 : i32
    %c0_i32_0 = arith.constant 0 : i32
    %c0_i32_1 = arith.constant 0 : i32
    return %c0_i32, %c0_i32_0 : i32, i32
  }
  func.func @transform_3(%arg0: i32) -> (i32, i32) {
    %c0_i32 = arith.constant 0 : i32
    %c0_i32_0 = arith.constant 0 : i32
    %c0_i32_1 = arith.constant 0 : i32
    return %c0_i32, %c0_i32_0 : i32, i32
  }
  func.func @transform_4(%arg0: i32) -> (i32, i32) {
    %c0_i32 = arith.constant 0 : i32
    %c0_i32_0 = arith.constant 0 : i32
    %c0_i32_1 = arith.constant 0 : i32
    return %c0_i32, %c0_i32_0 : i32, i32
  }
  func.func @transform_5(%arg0: i32) -> (i32, i32) {
    %c0_i32 = arith.constant 0 : i32
    %c0_i32_0 = arith.constant 0 : i32
    %c0_i32_1 = arith.constant 0 : i32
    return %c0_i32, %c0_i32_0 : i32, i32
  }
  func.func @transform_6(%arg0: i32) -> (i32, i32) {
    %c0_i32 = arith.constant 0 : i32
    %c0_i32_0 = arith.constant 0 : i32
    %c0_i32_1 = arith.constant 0 : i32
    return %c0_i32, %c0_i32_0 : i32, i32
  }
  func.func @transform_7(%arg0: i32) -> (i32, i32) {
    %c0_i32 = arith.constant 0 : i32
    %c0_i32_0 = arith.constant 0 : i32
    %c0_i32_1 = arith.constant 0 : i32
    return %c0_i32, %c0_i32_0 : i32, i32
  }
  func.func @transform_8(%arg0: i32) -> (i32, i32) {
    %c0_i32 = arith.constant 0 : i32
    %c0_i32_0 = arith.constant 0 : i32
    %c0_i32_1 = arith.constant 0 : i32
    return %c0_i32, %c0_i32_0 : i32, i32
  }
  func.func @transform_9(%arg0: i32) -> (i32, i32) {
    %c0_i32 = arith.constant 0 : i32
    %c0_i32_0 = arith.constant 0 : i32
    return %c0_i32, %arg0 : i32, i32
  }
}

</mosaic_0001>

<llo_original>
// kernel: tpu_custom_call.1
$region0: #{tpu_custom_call.1}
  #allocation0 [shape = 'u32[]', space=smem, size = 0x4, offset = 0x4, fixed_abs, tag = 'smem constant byte address 0x4 - core index']
  #allocation1 [shape = 'u32[72,128]{1,0:T(1,128)}', space=vmem, size = 0x9000, scoped, tag = 'internal scratch']
  #allocation2 [shape = 'f32[1,1]{1,0:T(1,128)S(1)}', space=vmem, size = 0x200, scoped, tag = 'scoped memory for tpu_custom_call.1']
  %s0 = inlined_call_operand.vmem [shape: f32[8,256], index: 0, kind: input, shape index: {}]
  %s1 = inlined_call_operand.vmem [shape: f32[32,8], index: 1, kind: input, shape index: {}]
  %s2 = inlined_call_operand.vmem [shape: f32[32,1], index: 2, kind: input, shape index: {}]
  %s3 = inlined_call_operand.vmem [shape: f32[32,32], index: 3, kind: input, shape index: {}]
  %s4 = inlined_call_operand.vmem [shape: f32[32,1], index: 4, kind: input, shape index: {}]
  %s5 = inlined_call_operand.vmem [shape: f32[32,32], index: 5, kind: input, shape index: {}]
  %s6 = inlined_call_operand.vmem [shape: f32[32,1], index: 6, kind: input, shape index: {}]
  %s7 = inlined_call_operand.vmem [shape: f32[1,32], index: 7, kind: input, shape index: {}]
  %s8 = inlined_call_operand.<no memory space> [shape: f32[1,1], index: 8, kind: input, shape index: {}]
  %s9 = inlined_call_operand.hbm [shape: f32[1,256], index: 9, kind: output, shape index: {}]
  %s10 = sld [smem:[#allocation0]]
  $region46: #{tpu_custom_call.1} parent=0
    _
  %s12 = ssub.s32 1, %s10
  %s13 = scalar_select 0, %s12, %s10
  %v14 = vstv %s8
  %15 = vst [vmem:[#allocation2] sm:$0x1] %v14
  $region1: #{tpu_custom_call.1} parent=0
    #allocation3 [shape = 'u8[1024]{0}', space=vmem, size = 0x400, scoped, tag = 'output window, operand 0, single buffered']
    #allocation4 [shape = 's32[1]{0}', space=sflag, size = 0x4, scoped, tag = 'scoped memory for tpu_custom_call.1']
    %16 = vsyncpa [#allocation4], 0
    // Predicated region
    $region2: #{tpu_custom_call.1} parent=1 // pred_check
      _
    $region3: #{tpu_custom_call.1} parent=1 // pred_check_branch
      %18 = sbr.rel (0) target = $region5
    $region4: #{tpu_custom_call.1} parent=1 // pred_region
      _
    $region5: #{tpu_custom_call.1} parent=1 // pred_fallthru
      _
    // Predicated region
    $region6: #{tpu_custom_call.1} parent=1 // pred_check
      _
    $region7: #{tpu_custom_call.1} parent=1 // pred_check_branch
      %20 = sbr.rel (0) target = $region9
    $region8: #{tpu_custom_call.1} parent=1 // pred_region
      _
    $region9: #{tpu_custom_call.1} parent=1 // pred_fallthru
      _
    // Predicated region
    $region10: #{tpu_custom_call.1} parent=1 // pred_check
      _
    $region11: #{tpu_custom_call.1} parent=1 // pred_check_branch
      %22 = sbr.rel (0) target = $region13
    $region12: #{tpu_custom_call.1} parent=1 // pred_region
      _
    $region13: #{tpu_custom_call.1} parent=1 // pred_fallthru
      _
    // Predicated region
    $region14: #{tpu_custom_call.1} parent=1 // pred_check
      _
    $region15: #{tpu_custom_call.1} parent=1 // pred_check_branch
      %24 = sbr.rel (0) target = $region17
    $region16: #{tpu_custom_call.1} parent=1 // pred_region
      _
    $region17: #{tpu_custom_call.1} parent=1 // pred_fallthru
      _
    // Predicated region
    $region18: #{tpu_custom_call.1} parent=1 // pred_check
      _
    $region19: #{tpu_custom_call.1} parent=1 // pred_check_branch
      %26 = sbr.rel (0) target = $region21
    $region20: #{tpu_custom_call.1} parent=1 // pred_region
      _
    $region21: #{tpu_custom_call.1} parent=1 // pred_fallthru
      _
    // Predicated region
    $region22: #{tpu_custom_call.1} parent=1 // pred_check
      _
    $region23: #{tpu_custom_call.1} parent=1 // pred_check_branch
      %28 = sbr.rel (0) target = $region25
    $region24: #{tpu_custom_call.1} parent=1 // pred_region
      _
    $region25: #{tpu_custom_call.1} parent=1 // pred_fallthru
      _
    // Predicated region
    $region26: #{tpu_custom_call.1} parent=1 // pred_check
      _
    $region27: #{tpu_custom_call.1} parent=1 // pred_check_branch
      %30 = sbr.rel (0) target = $region29
    $region28: #{tpu_custom_call.1} parent=1 // pred_region
      _
    $region29: #{tpu_custom_call.1} parent=1 // pred_fallthru
      _
    // Predicated region
    $region30: #{tpu_custom_call.1} parent=1 // pred_check
      _
    $region31: #{tpu_custom_call.1} parent=1 // pred_check_branch
      %32 = sbr.rel (0) target = $region33
    $region32: #{tpu_custom_call.1} parent=1 // pred_region
      _
    $region33: #{tpu_custom_call.1} parent=1 // pred_fallthru
      _
    // Predicated region
    $region34: #{tpu_custom_call.1} parent=1 // pred_check
      _
    $region35: #{tpu_custom_call.1} parent=1 // pred_check_branch
      %34 = sbr.rel (0) target = $region37
    $region36: #{tpu_custom_call.1} parent=1 // pred_region
      _
    $region37: #{tpu_custom_call.1} parent=1 // pred_fallthru
      _
    %v35 = vld [vmem:[%s0] sm:$0xff]
    %v36 = vld [vmem:[%s0 + $0x8] sm:$0xff]
    %v37 = vld [vmem:[%s1] sm:$0xff]
    %v38 = vld [vmem:[%s1 + $0x8] sm:$0xff]
    %v39 = vld [vmem:[%s1 + $0x10] sm:$0xff]
    %v40 = vld [vmem:[%s1 + $0x18] sm:$0xff]
    %v41 = vld [vmem:[%s2] sm:$0xff]
    %v42 = vld [vmem:[%s2 + $0x8] sm:$0xff]
    %v43 = vld [vmem:[%s2 + $0x10] sm:$0xff]
    %v44 = vld [vmem:[%s2 + $0x18] sm:$0xff]
    %46 = vset.pattern.permute.xlu0 0
    %47 = vperm.xlu0 %46, %v41
    %v48 = vpop.permute.xlu0 %47
    %51 = vset.pattern.permute.xlu0 0
    %52 = vperm.xlu0 %51, %v42
    %v53 = vpop.permute.xlu0 %52
    %56 = vset.pattern.permute.xlu0 0
    %57 = vperm.xlu0 %56, %v43
    %v58 = vpop.permute.xlu0 %57
    %61 = vset.pattern.permute.xlu0 0
    %62 = vperm.xlu0 %61, %v44
    %v63 = vpop.permute.xlu0 %62
    %vm65 = vcmask 64512
    %v67 = vsel %vm65, %v37, 0
    %v70 = vsel %vm65, %v38, 0
    %v73 = vsel %vm65, %v39, 0
    %v76 = vsel %vm65, %v40, 0
    %78 = vmatpush.msra.mxu0 0.0
    %79 = vmatpush.msra.mxu0 0.0
    %80 = vmatpush.msra.mxu0 0.0
    %81 = vmatpush.msra.mxu0 0.0
    %82 = vmatpush.msra.mxu0 0.0
    %83 = vmatpush.msra.mxu0 0.0
    %84 = vmatpush.msra.mxu0 0.0
    %85 = vmatpush.msra.mxu0 0.0
    %86 = vmatpush.msra.mxu0 0.0
    %87 = vmatpush.msra.mxu0 0.0
    %88 = vmatpush.msra.mxu0 0.0
    %89 = vmatpush.msra.mxu0 0.0
    %90 = vmatpush.msra.mxu0 0.0
    %91 = vmatpush.msra.mxu0 0.0
    %92 = vmatpush.msra.mxu0 0.0
    %93 = vmatpush.msra.mxu0 %v35
    %94 = vmatmul.f32.gmra.mxu0 %v67
    %v95 = vpop.f32.mrf.mxu0
    %v96 = vadd.f32 %v48, %v95
    %97 = vmatmul.f32.gmra.mxu0 %v70
    %v98 = vpop.f32.mrf.mxu0
    %v99 = vadd.f32 %v53, %v98
    %100 = vmatmul.f32.gmra.mxu0 %v73
    %v101 = vpop.f32.mrf.mxu0
    %v102 = vadd.f32 %v58, %v101
    %103 = vmatmul.f32.gmra.mxu0 %v76
    %v104 = vpop.f32.mrf.mxu0
    %v105 = vadd.f32 %v63, %v104
    %106 = vdwg.mxu0
    %107 = vmatpush.msra.mxu0 0.0
    %108 = vmatpush.msra.mxu0 0.0
    %109 = vmatpush.msra.mxu0 0.0
    %110 = vmatpush.msra.mxu0 0.0
    %111 = vmatpush.msra.mxu0 0.0
    %112 = vmatpush.msra.mxu0 0.0
    %113 = vmatpush.msra.mxu0 0.0
    %114 = vmatpush.msra.mxu0 0.0
    %115 = vmatpush.msra.mxu0 0.0
    %116 = vmatpush.msra.mxu0 0.0
    %117 = vmatpush.msra.mxu0 0.0
    %118 = vmatpush.msra.mxu0 0.0
    %119 = vmatpush.msra.mxu0 0.0
    %120 = vmatpush.msra.mxu0 0.0
    %121 = vmatpush.msra.mxu0 0.0
    %122 = vmatpush.msra.mxu0 %v36
    %123 = vmatmul.f32.gmra.mxu0 %v67
    %v124 = vpop.f32.mrf.mxu0
    %v125 = vadd.f32 %v48, %v124
    %126 = vmatmul.f32.gmra.mxu0 %v70
    %v127 = vpop.f32.mrf.mxu0
    %v128 = vadd.f32 %v53, %v127
    %129 = vmatmul.f32.gmra.mxu0 %v73
    %v130 = vpop.f32.mrf.mxu0
    %v131 = vadd.f32 %v58, %v130
    %132 = vmatmul.f32.gmra.mxu0 %v76
    %v133 = vpop.f32.mrf.mxu0
    %v134 = vadd.f32 %v63, %v133
    %135 = vdwg.mxu0
    %v136 = vand.u32 2147483647, %v96
    %v137 = vand.u32 2147483647, %v125
    %v138 = vand.u32 2147483647, %v99
    %v139 = vand.u32 2147483647, %v128
    %v140 = vand.u32 2147483647, %v102
    %v141 = vand.u32 2147483647, %v131
    %v142 = vand.u32 2147483647, %v105
    %v143 = vand.u32 2147483647, %v134
    %v144 = vsub.f32 1.5, %v136
    %v145 = vsub.f32 1.5, %v137
    %v146 = vsub.f32 1.5, %v138
    %v147 = vsub.f32 1.5, %v139
    %v148 = vsub.f32 1.5, %v140
    %v149 = vsub.f32 1.5, %v141
    %v150 = vsub.f32 1.5, %v142
    %v151 = vsub.f32 1.5, %v143
    %v152 = vmul.f32 %v144, 0.5
    %v153 = vmul.f32 %v145, 0.5
    %v154 = vmul.f32 %v146, 0.5
    %v155 = vmul.f32 %v147, 0.5
    %v156 = vmul.f32 %v148, 0.5
    %v157 = vmul.f32 %v149, 0.5
    %v158 = vmul.f32 %v150, 0.5
    %v159 = vmul.f32 %v151, 0.5
    %v160 = vmul.f32 %v152, %v144
    %v161 = vmul.f32 %v153, %v145
    %v162 = vmul.f32 %v154, %v146
    %v163 = vmul.f32 %v155, %v147
    %v164 = vmul.f32 %v156, %v148
    %v165 = vmul.f32 %v157, %v149
    %v166 = vmul.f32 %v158, %v150
    %v167 = vmul.f32 %v159, %v151
    %v168 = vmul.f32 %v96, %v96
    %v169 = vmul.f32 %v125, %v125
    %v170 = vmul.f32 %v99, %v99
    %v171 = vmul.f32 %v128, %v128
    %v172 = vmul.f32 %v102, %v102
    %v173 = vmul.f32 %v131, %v131
    %v174 = vmul.f32 %v105, %v105
    %v175 = vmul.f32 %v134, %v134
    %v176 = vsub.f32 0.75, %v168
    %v177 = vsub.f32 0.75, %v169
    %v178 = vsub.f32 0.75, %v170
    %v179 = vsub.f32 0.75, %v171
    %v180 = vsub.f32 0.75, %v172
    %v181 = vsub.f32 0.75, %v173
    %v182 = vsub.f32 0.75, %v174
    %v183 = vsub.f32 0.75, %v175
    %vm184 = vcmp.lt.f32.partialorder %v136, 0.5
    %vm185 = vcmp.lt.f32.partialorder %v137, 0.5
    %vm186 = vcmp.lt.f32.partialorder %v138, 0.5
    %vm187 = vcmp.lt.f32.partialorder %v139, 0.5
    %vm188 = vcmp.lt.f32.partialorder %v140, 0.5
    %vm189 = vcmp.lt.f32.partialorder %v141, 0.5
    %vm190 = vcmp.lt.f32.partialorder %v142, 0.5
    %vm191 = vcmp.lt.f32.partialorder %v143, 0.5
    %v192 = vsel %vm184, %v176, %v160
    %v193 = vsel %vm185, %v177, %v161
    %v194 = vsel %vm186, %v178, %v162
    %v195 = vsel %vm187, %v179, %v163
    %v196 = vsel %vm188, %v180, %v164
    %v197 = vsel %vm189, %v181, %v165
    %v198 = vsel %vm190, %v182, %v166
    %v199 = vsel %vm191, %v183, %v167
    %vm200 = vcmp.lt.f32.partialorder %v136, 1.5
    %vm201 = vcmp.lt.f32.partialorder %v137, 1.5
    %vm202 = vcmp.lt.f32.partialorder %v138, 1.5
    %vm203 = vcmp.lt.f32.partialorder %v139, 1.5
    %vm204 = vcmp.lt.f32.partialorder %v140, 1.5
    %vm205 = vcmp.lt.f32.partialorder %v141, 1.5
    %vm206 = vcmp.lt.f32.partialorder %v142, 1.5
    %vm207 = vcmp.lt.f32.partialorder %v143, 1.5
    %v208 = vsel %vm200, %v192, 0.0
    %v209 = vsel %vm201, %v193, 0.0
    %v210 = vsel %vm202, %v194, 0.0
    %v211 = vsel %vm203, %v195, 0.0
    %v212 = vsel %vm204, %v196, 0.0
    %v213 = vsel %vm205, %v197, 0.0
    %v214 = vsel %vm206, %v198, 0.0
    %v215 = vsel %vm207, %v199, 0.0
    %v216 = vld [vmem:[%s3] sm:$0xff]
    %v217 = vld [vmem:[%s3 + $0x8] sm:$0xff]
    %v218 = vld [vmem:[%s3 + $0x10] sm:$0xff]
    %v219 = vld [vmem:[%s3 + $0x18] sm:$0xff]
    %v220 = vld [vmem:[%s4] sm:$0xff]
    %v221 = vld [vmem:[%s4 + $0x8] sm:$0xff]
    %v222 = vld [vmem:[%s4 + $0x10] sm:$0xff]
    %v223 = vld [vmem:[%s4 + $0x18] sm:$0xff]
    %225 = vset.pattern.permute.xlu0 0
    %226 = vperm.xlu0 %225, %v220
    %v227 = vpop.permute.xlu0 %226
    %230 = vset.pattern.permute.xlu0 0
    %231 = vperm.xlu0 %230, %v221
    %v232 = vpop.permute.xlu0 %231
    %235 = vset.pattern.permute.xlu0 0
    %236 = vperm.xlu0 %235, %v222
    %v237 = vpop.permute.xlu0 %236
    %240 = vset.pattern.permute.xlu0 0
    %241 = vperm.xlu0 %240, %v223
    %v242 = vpop.permute.xlu0 %241
    %vm244 = vcmask 261120
    %v246 = vsel %vm244, %v216, 0
    %v249 = vsel %vm244, %v217, 0
    %v252 = vsel %vm244, %v218, 0
    %v255 = vsel %vm244, %v219, 0
    %257 = vmatpush.msra.mxu0 0.0
    %258 = vmatpush.msra.mxu0 0.0
    %259 = vmatpush.msra.mxu0 0.0
    %260 = vmatpush.msra.mxu0 0.0
    %261 = vmatpush.msra.mxu0 0.0
    %262 = vmatpush.msra.mxu0 0.0
    %263 = vmatpush.msra.mxu0 0.0
    %264 = vmatpush.msra.mxu0 0.0
    %265 = vmatpush.msra.mxu0 0.0
    %266 = vmatpush.msra.mxu0 0.0
    %267 = vmatpush.msra.mxu0 0.0
    %268 = vmatpush.msra.mxu0 0.0
    %269 = vmatpush.msra.mxu0 %v214
    %270 = vmatpush.msra.mxu0 %v212
    %271 = vmatpush.msra.mxu0 %v210
    %272 = vmatpush.msra.mxu0 %v208
    %273 = vmatmul.f32.gmra.mxu0 %v246
    %v274 = vpop.f32.mrf.mxu0
    %v275 = vadd.f32 %v227, %v274
    %276 = vmatmul.f32.gmra.mxu0 %v249
    %v277 = vpop.f32.mrf.mxu0
    %v278 = vadd.f32 %v232, %v277
    %279 = vmatmul.f32.gmra.mxu0 %v252
    %v280 = vpop.f32.mrf.mxu0
    %v281 = vadd.f32 %v237, %v280
    %282 = vmatmul.f32.gmra.mxu0 %v255
    %v283 = vpop.f32.mrf.mxu0
    %v284 = vadd.f32 %v242, %v283
    %285 = vdwg.mxu0
    %286 = vmatpush.msra.mxu0 0.0
    %287 = vmatpush.msra.mxu0 0.0
    %288 = vmatpush.msra.mxu0 0.0
    %289 = vmatpush.msra.mxu0 0.0
    %290 = vmatpush.msra.mxu0 0.0
    %291 = vmatpush.msra.mxu0 0.0
    %292 = vmatpush.msra.mxu0 0.0
    %293 = vmatpush.msra.mxu0 0.0
    %294 = vmatpush.msra.mxu0 0.0
    %295 = vmatpush.msra.mxu0 0.0
    %296 = vmatpush.msra.mxu0 0.0
    %297 = vmatpush.msra.mxu0 0.0
    %298 = vmatpush.msra.mxu0 %v215
    %299 = vmatpush.msra.mxu0 %v213
    %300 = vmatpush.msra.mxu0 %v211
    %301 = vmatpush.msra.mxu0 %v209
    %302 = vmatmul.f32.gmra.mxu0 %v246
    %v303 = vpop.f32.mrf.mxu0
    %v304 = vadd.f32 %v227, %v303
    %305 = vmatmul.f32.gmra.mxu0 %v249
    %v306 = vpop.f32.mrf.mxu0
    %v307 = vadd.f32 %v232, %v306
    %308 = vmatmul.f32.gmra.mxu0 %v252
    %v309 = vpop.f32.mrf.mxu0
    %v310 = vadd.f32 %v237, %v309
    %311 = vmatmul.f32.gmra.mxu0 %v255
    %v312 = vpop.f32.mrf.mxu0
    %v313 = vadd.f32 %v242, %v312
    %314 = vdwg.mxu0
    %v315 = vand.u32 2147483647, %v275
    %v316 = vand.u32 2147483647, %v304
    %v317 = vand.u32 2147483647, %v278
    %v318 = vand.u32 2147483647, %v307
    %v319 = vand.u32 2147483647, %v281
    %v320 = vand.u32 2147483647, %v310
    %v321 = vand.u32 2147483647, %v284
    %v322 = vand.u32 2147483647, %v313
    %v323 = vsub.f32 1.5, %v315
    %v324 = vsub.f32 1.5, %v316
    %v325 = vsub.f32 1.5, %v317
    %v326 = vsub.f32 1.5, %v318
    %v327 = vsub.f32 1.5, %v319
    %v328 = vsub.f32 1.5, %v320
    %v329 = vsub.f32 1.5, %v321
    %v330 = vsub.f32 1.5, %v322
    %v331 = vmul.f32 %v323, 0.5
    %v332 = vmul.f32 %v324, 0.5
    %v333 = vmul.f32 %v325, 0.5
    %v334 = vmul.f32 %v326, 0.5
    %v335 = vmul.f32 %v327, 0.5
    %v336 = vmul.f32 %v328, 0.5
    %v337 = vmul.f32 %v329, 0.5
    %v338 = vmul.f32 %v330, 0.5
    %v339 = vmul.f32 %v331, %v323
    %v340 = vmul.f32 %v332, %v324
    %v341 = vmul.f32 %v333, %v325
    %v342 = vmul.f32 %v334, %v326
    %v343 = vmul.f32 %v335, %v327
    %v344 = vmul.f32 %v336, %v328
    %v345 = vmul.f32 %v337, %v329
    %v346 = vmul.f32 %v338, %v330
    %v347 = vmul.f32 %v275, %v275
    %v348 = vmul.f32 %v304, %v304
    %v349 = vmul.f32 %v278, %v278
    %v350 = vmul.f32 %v307, %v307
    %v351 = vmul.f32 %v281, %v281
    %v352 = vmul.f32 %v310, %v310
    %v353 = vmul.f32 %v284, %v284
    %v354 = vmul.f32 %v313, %v313
    %v355 = vsub.f32 0.75, %v347
    %v356 = vsub.f32 0.75, %v348
    %v357 = vsub.f32 0.75, %v349
    %v358 = vsub.f32 0.75, %v350
    %v359 = vsub.f32 0.75, %v351
    %v360 = vsub.f32 0.75, %v352
    %v361 = vsub.f32 0.75, %v353
    %v362 = vsub.f32 0.75, %v354
    %vm363 = vcmp.lt.f32.partialorder %v315, 0.5
    %vm364 = vcmp.lt.f32.partialorder %v316, 0.5
    %vm365 = vcmp.lt.f32.partialorder %v317, 0.5
    %vm366 = vcmp.lt.f32.partialorder %v318, 0.5
    %vm367 = vcmp.lt.f32.partialorder %v319, 0.5
    %vm368 = vcmp.lt.f32.partialorder %v320, 0.5
    %vm369 = vcmp.lt.f32.partialorder %v321, 0.5
    %vm370 = vcmp.lt.f32.partialorder %v322, 0.5
    %v371 = vsel %vm363, %v355, %v339
    %v372 = vsel %vm364, %v356, %v340
    %v373 = vsel %vm365, %v357, %v341
    %v374 = vsel %vm366, %v358, %v342
    %v375 = vsel %vm367, %v359, %v343
    %v376 = vsel %vm368, %v360, %v344
    %v377 = vsel %vm369, %v361, %v345
    %v378 = vsel %vm370, %v362, %v346
    %vm379 = vcmp.lt.f32.partialorder %v315, 1.5
    %vm380 = vcmp.lt.f32.partialorder %v316, 1.5
    %vm381 = vcmp.lt.f32.partialorder %v317, 1.5
    %vm382 = vcmp.lt.f32.partialorder %v318, 1.5
    %vm383 = vcmp.lt.f32.partialorder %v319, 1.5
    %vm384 = vcmp.lt.f32.partialorder %v320, 1.5
    %vm385 = vcmp.lt.f32.partialorder %v321, 1.5
    %vm386 = vcmp.lt.f32.partialorder %v322, 1.5
    %v387 = vsel %vm379, %v371, 0.0
    %v388 = vsel %vm380, %v372, 0.0
    %v389 = vsel %vm381, %v373, 0.0
    %v390 = vsel %vm382, %v374, 0.0
    %v391 = vsel %vm383, %v375, 0.0
    %v392 = vsel %vm384, %v376, 0.0
    %v393 = vsel %vm385, %v377, 0.0
    %v394 = vsel %vm386, %v378, 0.0
    %v395 = vld [vmem:[%s5] sm:$0xff]
    %v396 = vld [vmem:[%s5 + $0x8] sm:$0xff]
    %v397 = vld [vmem:[%s5 + $0x10] sm:$0xff]
    %v398 = vld [vmem:[%s5 + $0x18] sm:$0xff]
    %v399 = vld [vmem:[%s6] sm:$0xff]
    %v400 = vld [vmem:[%s6 + $0x8] sm:$0xff]
    %v401 = vld [vmem:[%s6 + $0x10] sm:$0xff]
    %v402 = vld [vmem:[%s6 + $0x18] sm:$0xff]
    %404 = vset.pattern.permute.xlu0 0
    %405 = vperm.xlu0 %404, %v399
    %v406 = vpop.permute.xlu0 %405
    %409 = vset.pattern.permute.xlu0 0
    %410 = vperm.xlu0 %409, %v400
    %v411 = vpop.permute.xlu0 %410
    %414 = vset.pattern.permute.xlu0 0
    %415 = vperm.xlu0 %414, %v401
    %v416 = vpop.permute.xlu0 %415
    %419 = vset.pattern.permute.xlu0 0
    %420 = vperm.xlu0 %419, %v402
    %v421 = vpop.permute.xlu0 %420
    %v424 = vsel %vm244, %v395, 0
    %v427 = vsel %vm244, %v396, 0
    %v430 = vsel %vm244, %v397, 0
    %v433 = vsel %vm244, %v398, 0
    %435 = vmatpush.msra.mxu0 0.0
    %436 = vmatpush.msra.mxu0 0.0
    %437 = vmatpush.msra.mxu0 0.0
    %438 = vmatpush.msra.mxu0 0.0
    %439 = vmatpush.msra.mxu0 0.0
    %440 = vmatpush.msra.mxu0 0.0
    %441 = vmatpush.msra.mxu0 0.0
    %442 = vmatpush.msra.mxu0 0.0
    %443 = vmatpush.msra.mxu0 0.0
    %444 = vmatpush.msra.mxu0 0.0
    %445 = vmatpush.msra.mxu0 0.0
    %446 = vmatpush.msra.mxu0 0.0
    %447 = vmatpush.msra.mxu0 %v393
    %448 = vmatpush.msra.mxu0 %v391
    %449 = vmatpush.msra.mxu0 %v389
    %450 = vmatpush.msra.mxu0 %v387
    %451 = vmatmul.f32.gmra.mxu0 %v424
    %v452 = vpop.f32.mrf.mxu0
    %v453 = vadd.f32 %v406, %v452
    %454 = vmatmul.f32.gmra.mxu0 %v427
    %v455 = vpop.f32.mrf.mxu0
    %v456 = vadd.f32 %v411, %v455
    %457 = vmatmul.f32.gmra.mxu0 %v430
    %v458 = vpop.f32.mrf.mxu0
    %v459 = vadd.f32 %v416, %v458
    %460 = vmatmul.f32.gmra.mxu0 %v433
    %v461 = vpop.f32.mrf.mxu0
    %v462 = vadd.f32 %v421, %v461
    %463 = vdwg.mxu0
    %464 = vmatpush.msra.mxu0 0.0
    %465 = vmatpush.msra.mxu0 0.0
    %466 = vmatpush.msra.mxu0 0.0
    %467 = vmatpush.msra.mxu0 0.0
    %468 = vmatpush.msra.mxu0 0.0
    %469 = vmatpush.msra.mxu0 0.0
    %470 = vmatpush.msra.mxu0 0.0
    %471 = vmatpush.msra.mxu0 0.0
    %472 = vmatpush.msra.mxu0 0.0
    %473 = vmatpush.msra.mxu0 0.0
    %474 = vmatpush.msra.mxu0 0.0
    %475 = vmatpush.msra.mxu0 0.0
    %476 = vmatpush.msra.mxu0 %v394
    %477 = vmatpush.msra.mxu0 %v392
    %478 = vmatpush.msra.mxu0 %v390
    %479 = vmatpush.msra.mxu0 %v388
    %480 = vmatmul.f32.gmra.mxu0 %v424
    %v481 = vpop.f32.mrf.mxu0
    %v482 = vadd.f32 %v406, %v481
    %483 = vmatmul.f32.gmra.mxu0 %v427
    %v484 = vpop.f32.mrf.mxu0
    %v485 = vadd.f32 %v411, %v484
    %486 = vmatmul.f32.gmra.mxu0 %v430
    %v487 = vpop.f32.mrf.mxu0
    %v488 = vadd.f32 %v416, %v487
    %489 = vmatmul.f32.gmra.mxu0 %v433
    %v490 = vpop.f32.mrf.mxu0
    %v491 = vadd.f32 %v421, %v490
    %492 = vdwg.mxu0
    %v493 = vand.u32 2147483647, %v453
    %v494 = vand.u32 2147483647, %v482
    %v495 = vand.u32 2147483647, %v456
    %v496 = vand.u32 2147483647, %v485
    %v497 = vand.u32 2147483647, %v459
    %v498 = vand.u32 2147483647, %v488
    %v499 = vand.u32 2147483647, %v462
    %v500 = vand.u32 2147483647, %v491
    %v501 = vsub.f32 1.5, %v493
    %v502 = vsub.f32 1.5, %v494
    %v503 = vsub.f32 1.5, %v495
    %v504 = vsub.f32 1.5, %v496
    %v505 = vsub.f32 1.5, %v497
    %v506 = vsub.f32 1.5, %v498
    %v507 = vsub.f32 1.5, %v499
    %v508 = vsub.f32 1.5, %v500
    %v509 = vmul.f32 %v501, 0.5
    %v510 = vmul.f32 %v502, 0.5
    %v511 = vmul.f32 %v503, 0.5
    %v512 = vmul.f32 %v504, 0.5
    %v513 = vmul.f32 %v505, 0.5
    %v514 = vmul.f32 %v506, 0.5
    %v515 = vmul.f32 %v507, 0.5
    %v516 = vmul.f32 %v508, 0.5
    %v517 = vmul.f32 %v509, %v501
    %v518 = vmul.f32 %v510, %v502
    %v519 = vmul.f32 %v511, %v503
    %v520 = vmul.f32 %v512, %v504
    %v521 = vmul.f32 %v513, %v505
    %v522 = vmul.f32 %v514, %v506
    %v523 = vmul.f32 %v515, %v507
    %v524 = vmul.f32 %v516, %v508
    %v525 = vmul.f32 %v453, %v453
    %v526 = vmul.f32 %v482, %v482
    %v527 = vmul.f32 %v456, %v456
    %v528 = vmul.f32 %v485, %v485
    %v529 = vmul.f32 %v459, %v459
    %v530 = vmul.f32 %v488, %v488
    %v531 = vmul.f32 %v462, %v462
    %v532 = vmul.f32 %v491, %v491
    %v533 = vsub.f32 0.75, %v525
    %v534 = vsub.f32 0.75, %v526
    %v535 = vsub.f32 0.75, %v527
    %v536 = vsub.f32 0.75, %v528
    %v537 = vsub.f32 0.75, %v529
    %v538 = vsub.f32 0.75, %v530
    %v539 = vsub.f32 0.75, %v531
    %v540 = vsub.f32 0.75, %v532
    %vm541 = vcmp.lt.f32.partialorder %v493, 0.5
    %vm542 = vcmp.lt.f32.partialorder %v494, 0.5
    %vm543 = vcmp.lt.f32.partialorder %v495, 0.5
    %vm544 = vcmp.lt.f32.partialorder %v496, 0.5
    %vm545 = vcmp.lt.f32.partialorder %v497, 0.5
    %vm546 = vcmp.lt.f32.partialorder %v498, 0.5
    %vm547 = vcmp.lt.f32.partialorder %v499, 0.5
    %vm548 = vcmp.lt.f32.partialorder %v500, 0.5
    %v549 = vsel %vm541, %v533, %v517
    %v550 = vsel %vm542, %v534, %v518
    %v551 = vsel %vm543, %v535, %v519
    %v552 = vsel %vm544, %v536, %v520
    %v553 = vsel %vm545, %v537, %v521
    %v554 = vsel %vm546, %v538, %v522
    %v555 = vsel %vm547, %v539, %v523
    %v556 = vsel %vm548, %v540, %v524
    %vm557 = vcmp.lt.f32.partialorder %v493, 1.5
    %vm558 = vcmp.lt.f32.partialorder %v494, 1.5
    %vm559 = vcmp.lt.f32.partialorder %v495, 1.5
    %vm560 = vcmp.lt.f32.partialorder %v496, 1.5
    %vm561 = vcmp.lt.f32.partialorder %v497, 1.5
    %vm562 = vcmp.lt.f32.partialorder %v498, 1.5
    %vm563 = vcmp.lt.f32.partialorder %v499, 1.5
    %vm564 = vcmp.lt.f32.partialorder %v500, 1.5
    %v565 = vsel %vm557, %v549, 0.0
    %v566 = vsel %vm558, %v550, 0.0
    %v567 = vsel %vm559, %v551, 0.0
    %v568 = vsel %vm560, %v552, 0.0
    %v569 = vsel %vm561, %v553, 0.0
    %v570 = vsel %vm562, %v554, 0.0
    %v571 = vsel %vm563, %v555, 0.0
    %v572 = vsel %vm564, %v556, 0.0
    %v573 = vld [vmem:[%s7] sm:$0x1]
    %v574 = vld [vmem:[#allocation2] sm:$0x1]
    %576 = vset.pattern.permute.xlu0 0
    %577 = vperm.xlu0 %576, %v574
    %v578 = vpop.permute.xlu0 %577
    %v580 = vperm.slane %v578, 0
    %v582 = vsel %vm244, %v573, 0
    %584 = vmatpush.msra.mxu0 0.0
    %585 = vmatpush.msra.mxu0 0.0
    %586 = vmatpush.msra.mxu0 0.0
    %587 = vmatpush.msra.mxu0 0.0
    %588 = vmatpush.msra.mxu0 0.0
    %589 = vmatpush.msra.mxu0 0.0
    %590 = vmatpush.msra.mxu0 0.0
    %591 = vmatpush.msra.mxu0 0.0
    %592 = vmatpush.msra.mxu0 0.0
    %593 = vmatpush.msra.mxu0 0.0
    %594 = vmatpush.msra.mxu0 0.0
    %595 = vmatpush.msra.mxu0 0.0
    %596 = vmatpush.msra.mxu0 %v571
    %597 = vmatpush.msra.mxu0 %v569
    %598 = vmatpush.msra.mxu0 %v567
    %599 = vmatpush.msra.mxu0 %v565
    %600 = vmatmul.f32.gmra.mxu0 %v582
    %v601 = vpop.f32.mrf.mxu0
    %v602 = vadd.f32 %v580, %v601
    %603 = vdwg.mxu0
    %604 = vmatpush.msra.mxu0 0.0
    %605 = vmatpush.msra.mxu0 0.0
    %606 = vmatpush.msra.mxu0 0.0
    %607 = vmatpush.msra.mxu0 0.0
    %608 = vmatpush.msra.mxu0 0.0
    %609 = vmatpush.msra.mxu0 0.0
    %610 = vmatpush.msra.mxu0 0.0
    %611 = vmatpush.msra.mxu0 0.0
    %612 = vmatpush.msra.mxu0 0.0
    %613 = vmatpush.msra.mxu0 0.0
    %614 = vmatpush.msra.mxu0 0.0
    %615 = vmatpush.msra.mxu0 0.0
    %616 = vmatpush.msra.mxu0 %v572
    %617 = vmatpush.msra.mxu0 %v570
    %618 = vmatpush.msra.mxu0 %v568
    %619 = vmatpush.msra.mxu0 %v566
    %620 = vmatmul.f32.gmra.mxu0 %v582
    %v621 = vpop.f32.mrf.mxu0
    %v622 = vadd.f32 %v580, %v621
    %623 = vdwg.mxu0
    %v626 = vrot.slane %v622, 7
    %vm627 = vcmask 1040384
    %v628 = vsel %vm627, %v602, %v626
    %v630 = vlaneseq
    %vm631 = vcmp.ge.s32.totalorder %v630, 0
    %vm632 = vcmp.lt.s32.totalorder %v630, 256
    %vm633 = vmand %vm631, %vm632
    %634 = vst.msk [vmem:[#allocation3] sm:$0x3] %vm633, %v628
    // Predicated region
    $region38: #{tpu_custom_call.1} parent=1 // pred_check
      _
    $region39: #{tpu_custom_call.1} parent=1 // pred_check_branch
      %636 = sbr.rel (0) target = $region41
    $region40: #{tpu_custom_call.1} parent=1 // pred_region
      %638 = vsyncadd [#allocation4], 0
      %s640 = sshll.u32 [#allocation3], 4
      %s641 = int_to_ptr.vmem [resolvable:$true] %s640
      %s642 = sshll.u32 %s9, 4
      %s643 = int_to_ptr.hbm [resolvable:$true] %s642
      %645 = dma.vmem_to_hbm [thread:$0]  %s641, 32, %s643, [#allocation4]
    $region41: #{tpu_custom_call.1} parent=1 // pred_fallthru
      _
    // Predicated region
    $region42: #{tpu_custom_call.1} parent=1 // pred_check
      _
    $region43: #{tpu_custom_call.1} parent=1 // pred_check_branch
      %647 = sbr.rel (0) target = $region45
    $region44: #{tpu_custom_call.1} parent=1 // pred_region
      %649 = dma.done [#allocation4], 32
    $region45: #{tpu_custom_call.1} parent=1 // pred_fallthru
      _
    %650 = vsyncpa [#allocation4], 1

</llo_original>
